<compile_context>
chip_gen: v6e
topology: v6e:2x2x1
jax: 0.10.0
libtpu: 0.0.40
codegen_flags: <defaults>
</compile_context>

<pallas_src>
import jax
import jax.numpy as jnp
import numpy as np
from jax.experimental import pallas as pl
from jax.experimental.pallas import tpu as pltpu


def _build_tap_masks(H, W):
    """(9, H*W) 0/1 masks reproducing zero-padding for each 3x3 stencil shift."""
    hw = H * W
    h = np.arange(hw) // W
    w = np.arange(hw) % W
    masks = np.ones((9, hw), np.float32)
    k = 0
    for sy in (-1, 0, 1):
        for sx in (-1, 0, 1):
            m = np.ones((hw,), np.float32)
            if sy == -1:
                m *= (h >= 1)
            elif sy == 1:
                m *= (h <= H - 2)
            if sx == -1:
                m *= (w >= 1)
            elif sx == 1:
                m *= (w <= W - 2)
            masks[k] = m
            k += 1
    return jnp.asarray(masks)


def _make_fused_rk4_call(B, C, H, W, T):
    BC, HW = B * C, H * W
    K9 = 9 * BC

    def kernel(t_ref, y0_ref, m_ref, bias_ref, masks_ref, out_ref, y_ref):
        i = pl.program_id(0)

        # Initialize the carried state from y0 on the first time step.
        @pl.when(i == 0)
        def _():
            y_ref[...] = y0_ref[...]

        m = m_ref[...]          # (BC, 9*BC)  conv + diffusion stencil matrix
        bias = bias_ref[...]    # (BC, HW)    conv bias, pre-broadcast
        masks = masks_ref[...]  # (9, HW)     zero-padding boundary masks

        def deriv(y):
            # dy/dt = model_phy(y) + model_aug(y): 9 rolled+masked copies of the
            # state, stacked along sublanes, hit with ONE lane-dense matmul.
            taps = []
            k = 0
            for sy in (-1, 0, 1):
                for sx in (-1, 0, 1):
                    shift = (-(sy * W + sx)) % HW
                    if shift == 0:
                        taps.append(y)
                    else:
                        taps.append(pltpu.roll(y, shift, axis=1)
                                    * masks[k:k + 1, :])
                    k += 1
            stacked = jnp.concatenate(taps, axis=0)            # (9*BC, HW)
            return jnp.dot(m, stacked,
                           preferred_element_type=jnp.float32) + bias

        y = y_ref[...]
        dt = t_ref[i + 1] - t_ref[i]                           # SMEM scalar

        # torchdiffeq fixed-grid 'rk4' step (rk4_alt_step_func, Kutta 3/8 rule)
        k1 = deriv(y)
        k2 = deriv(y + dt * k1 * (1.0 / 3.0))
        k3 = deriv(y + dt * (k2 - k1 * (1.0 / 3.0)))
        k4 = deriv(y + dt * (k1 - k2 + k3))
        y_new = y + dt * (k1 + 3.0 * (k2 + k3) + k4) * 0.125

        y_ref[...] = y_new
        out_ref[0] = y_new

    grid_spec = pltpu.PrefetchScalarGridSpec(
        num_scalar_prefetch=1,            # t -> SMEM, available to the kernel
        grid=(T - 1,),                    # full trajectory in one launch
        in_specs=[
            pl.BlockSpec((BC, HW), lambda i, t: (0, 0)),    # y0
            pl.BlockSpec((BC, K9), lambda i, t: (0, 0)),    # stencil matrix
            pl.BlockSpec((BC, HW), lambda i, t: (0, 0)),    # bias
            pl.BlockSpec((9, HW), lambda i, t: (0, 0)),     # boundary masks
        ],
        out_specs=pl.BlockSpec((1, BC, HW), lambda i, t: (i, 0, 0)),
        scratch_shapes=[pltpu.VMEM((BC, HW), jnp.float32)],  # carried state y_i
    )

    flops_per_deriv = 2 * BC * K9 * HW + 20 * BC * HW
    flops = (T - 1) * (4 * flops_per_deriv + 14 * BC * HW)
    bytes_accessed = 4 * ((T - 1) * BC * HW + 2 * BC * HW + BC * K9 + 9 * HW + T)

    return pl.pallas_call(
        kernel,
        grid_spec=grid_spec,
        out_shape=jax.ShapeDtypeStruct((T - 1, BC, HW), jnp.float32),
        compiler_params=pltpu.CompilerParams(
            dimension_semantics=("arbitrary",),   # time steps are sequential
        ),
        cost_estimate=pl.CostEstimate(
            flops=flops, transcendentals=0, bytes_accessed=bytes_accessed),
    )


class Forecaster:
    """JAX/Pallas port of the PyTorch `Forecaster` (is_augmented=True, method='rk4')."""

    def __init__(self, dcoef, conv_w, conv_b):
        # dcoef: (C,)   conv_w: (C_out, C_in, 3, 3) torch OIHW   conv_b: (C,)
        self.C = int(dcoef.shape[0])
        self.dcoef = jnp.asarray(dcoef, jnp.float32)
        self.conv_w = jnp.asarray(conv_w, jnp.float32)
        self.conv_b = jnp.asarray(conv_b, jnp.float32)

    def _mixing_matrix(self, B):
        """(B*C, 9*B*C): folds the 3x3 conv, the per-channel diffusion Laplacian
        and the per-batch block-diagonal structure into one stencil matrix."""
        C = self.C
        BC = B * C
        # (tap = kh*3+kw, c_out, c_in)
        w_taps = jnp.transpose(self.conv_w, (2, 3, 0, 1)).reshape(9, C, C)
        # 5-point Laplacian on the same taps: up/left/right/down = +1, center = -4
        lap = jnp.zeros((9,), jnp.float32).at[
            jnp.array([1, 3, 4, 5, 7])].set(
            jnp.array([1.0, 1.0, -4.0, 1.0, 1.0], jnp.float32))
        eye = jnp.eye(C, dtype=jnp.float32)
        blocks = w_taps + lap[:, None, None] * eye[None] * self.dcoef[None, :, None]
        blocks_t = jnp.transpose(blocks, (1, 0, 2))            # (c_out, tap, c_in)
        m5 = jnp.zeros((B, C, 9, B, C), jnp.float32)
        bidx = jnp.arange(B)
        m5 = m5.at[bidx, :, :, bidx, :].set(blocks_t)          # batch block-diagonal
        return m5.reshape(BC, 9 * BC)

    def __call__(self, y0, t):
        """y0: (B, C, H, W) NCHW, t: (T,).  Returns (B, C, T, H, W)."""
        B, C, H, W = y0.shape
        assert C == self.C
        T = int(t.shape[0])
        BC, HW = B * C, H * W

        y0_flat = jnp.asarray(y0, jnp.float32).reshape(BC, HW)  # lane-dense layout
        if T == 1:
            return y0_flat.reshape(B, C, 1, H, W)

        m = self._mixing_matrix(B)
        bias_full = jnp.broadcast_to(
            jnp.tile(self.conv_b, (B,))[:, None], (BC, HW)).astype(jnp.float32)
        masks = _build_tap_masks(H, W)

        run = _make_fused_rk4_call(B, C, H, W, T)
        steps = run(jnp.asarray(t, jnp.float32), y0_flat, m, bias_full, masks)

        traj = jnp.concatenate([y0_flat[None], steps], axis=0)  # (T, B*C, H*W)
        res = traj.reshape(T, B, C, H, W)                       # == odeint output
        return jnp.transpose(res, (1, 2, 0, 3, 4))              # res.permute(1,2,0,3,4)


# ---------------------------- pure-JAX reference ---------------------------------
def _deriv_ref_nchw(y, dcoef, conv_w, conv_b):
    yp = jnp.pad(y, ((0, 0), (0, 0), (1, 1), (1, 1)))
    lap = (yp[:, :, :-2, 1:-1] + yp[:, :, 2:, 1:-1]
           + yp[:, :, 1:-1, :-2] + yp[:, :, 1:-1, 2:] - 4.0 * y)
    phy = lap * dcoef[None, :, None, None]
    aug = jax.lax.conv_general_dilated(
        y, conv_w, (1, 1), "SAME",
        dimension_numbers=("NCHW", "OIHW", "NCHW"),
        precision=jax.lax.Precision.HIGHEST,
    ) + conv_b[None, :, None, None]
    return phy + aug


def forecaster_ref(y0, t, dcoef, conv_w, conv_b):
    f = lambda y: _deriv_ref_nchw(y, dcoef, conv_w, conv_b)
    y = y0.astype(jnp.float32)
    states = [y]
    for i in range(int(t.shape[0]) - 1):
        dt = (t[i + 1] - t[i]).astype(jnp.float32)
        k1 = f(y)
        k2 = f(y + dt * k1 / 3.0)
        k3 = f(y + dt * (k2 - k1 / 3.0))
        k4 = f(y + dt * (k1 - k2 + k3))
        y = y + dt * (k1 + 3.0 * (k2 + k3) + k4) * 0.125
        states.append(y)
    res = jnp.stack(states, axis=0)                     # (T, B, C, H, W)
    return jnp.transpose(res, (1, 2, 0, 3, 4))          # (B, C, T, H, W)


if __name__ == "__main__":
    B, C, H, W, T = 2, 4, 16, 16, 8

    key = jax.random.PRNGKey(0)
    k_y, k_w, k_b = jax.random.split(key, 3)

    y0 = jax.random.normal(k_y, (B, C, H, W), dtype=jnp.float32)            # NCHW input
    t = jnp.linspace(0.0, 0.7, T, dtype=jnp.float32)

    # Deterministic synthetic parameters (no checkpoint load).
    conv_w = 0.1 * jax.random.normal(k_w, (C, C, 3, 3), dtype=jnp.float32)  # torch OIHW
    conv_b = 0.05 * jax.random.normal(k_b, (C,), dtype=jnp.float32)
    dcoef = jnp.array([0.05, 0.10, 0.15, 0.20], dtype=jnp.float32)

    model = Forecaster(dcoef, conv_w, conv_b)
    out = jax.block_until_ready(model(y0, t))

    assert out.shape == (B, C, T, H, W), out.shape

    ref = jax.block_until_ready(forecaster_ref(y0, t, dcoef, conv_w, conv_b))
    np.testing.assert_allclose(np.asarray(out), np.asarray(ref), rtol=2e-3, atol=2e-3)

    print("KERNEL_OK")
</pallas_src>

<mosaic_0001>
module attributes {stable_mosaic.version = 11 : i64} {
  func.func @kernel(%arg0: i32, %arg1: memref<8xf32, #tpu.memory_space<smem>>, %arg2: memref<8x256xf32, #tpu.memory_space<vmem>>, %arg3: memref<8x72xf32, #tpu.memory_space<vmem>>, %arg4: memref<8x256xf32, #tpu.memory_space<vmem>>, %arg5: memref<9x256xf32, #tpu.memory_space<vmem>>, %arg6: memref<1x8x256xf32, #tpu.memory_space<vmem>>, %arg7: memref<8x256xf32, #tpu.memory_space<vmem>>) attributes {dimension_semantics = [#tpu.dimension_semantics<arbitrary>], iteration_bounds = array<i64: 7>, scalar_prefetch = 1 : i64, scratch_operands = 1 : i64, tpu.core_type = #tpu.core_type<tc>, window_params = [{pipeline_mode = #tpu.pipeline_mode<synchronous>, transform_indices = @transform_0, window_bounds = array<i64: 8, 256>}, {pipeline_mode = #tpu.pipeline_mode<synchronous>, transform_indices = @transform_1, window_bounds = array<i64: 8, 72>}, {pipeline_mode = #tpu.pipeline_mode<synchronous>, transform_indices = @transform_2, window_bounds = array<i64: 8, 256>}, {pipeline_mode = #tpu.pipeline_mode<synchronous>, transform_indices = @transform_3, window_bounds = array<i64: 9, 256>}, {transform_indices = @transform_4, window_bounds = array<i64: 1, 8, 256>}]} {
    %c0_i32 = arith.constant 0 : i32
    %0 = arith.cmpi eq, %arg0, %c0_i32 : i32
    %1 = arith.extui %0 : i1 to i32
    %c0_i32_0 = arith.constant 0 : i32
    %2 = arith.cmpi ne, %1, %c0_i32_0 : i32
    scf.if %2 {
      %c0_45 = arith.constant 0 : index
      %c0_46 = arith.constant 0 : index
      %183 = vector.load %arg2[%c0_45, %c0_46] : memref<8x256xf32, #tpu.memory_space<vmem>>, vector<8x256xf32>
      %c0_47 = arith.constant 0 : index
      %c0_48 = arith.constant 0 : index
      %184 = vector.load %arg7[%c0_47, %c0_48] : memref<8x256xf32, #tpu.memory_space<vmem>>, vector<8x256xf32>
      tpu.vector_store %arg7[%c0_47, %c0_48], %183 {strides = array<i32>} : memref<8x256xf32, #tpu.memory_space<vmem>>, vector<8x256xf32>,
    } else {
    }
    %c0 = arith.constant 0 : index
    %c0_1 = arith.constant 0 : index
    %3 = vector.load %arg3[%c0, %c0_1] : memref<8x72xf32, #tpu.memory_space<vmem>>, vector<8x72xf32>
    %c0_2 = arith.constant 0 : index
    %c0_3 = arith.constant 0 : index
    %4 = vector.load %arg4[%c0_2, %c0_3] : memref<8x256xf32, #tpu.memory_space<vmem>>, vector<8x256xf32>
    %c0_4 = arith.constant 0 : index
    %c0_5 = arith.constant 0 : index
    %5 = vector.load %arg5[%c0_4, %c0_5] : memref<9x256xf32, #tpu.memory_space<vmem>>, vector<9x256xf32>
    %c0_6 = arith.constant 0 : index
    %c0_7 = arith.constant 0 : index
    %6 = vector.load %arg7[%c0_6, %c0_7] : memref<8x256xf32, #tpu.memory_space<vmem>>, vector<8x256xf32>
    %c1_i32 = arith.constant 1 : i32
    %7 = arith.addi %arg0, %c1_i32 : i32
    %8 = arith.index_cast %7 : i32 to index
    %9 = memref.load %arg1[%8] : memref<8xf32, #tpu.memory_space<smem>>
    %10 = arith.index_cast %arg0 : i32 to index
    %11 = memref.load %arg1[%10] : memref<8xf32, #tpu.memory_space<smem>>
    %12 = arith.subf %9, %11 : f32
    %c17_i32 = arith.constant 17 : i32
    %13 = tpu.dynamic_rotate %6 by %c17_i32 dim 1 : vector<8x256xf32>, i32 -> vector<8x256xf32>
    %14 = vector.extract_strided_slice %5 {offsets = [0, 0], sizes = [1, 256], strides = [1, 1]} : vector<9x256xf32> to vector<1x256xf32>
    %15 = vector.broadcast %14 : vector<1x256xf32> to vector<8x256xf32>
    %16 = arith.mulf %13, %15 : vector<8x256xf32>
    %c16_i32 = arith.constant 16 : i32
    %17 = tpu.dynamic_rotate %6 by %c16_i32 dim 1 : vector<8x256xf32>, i32 -> vector<8x256xf32>
    %18 = vector.extract_strided_slice %5 {offsets = [1, 0], sizes = [1, 256], strides = [1, 1]} : vector<9x256xf32> to vector<1x256xf32>
    %19 = vector.broadcast %18 : vector<1x256xf32> to vector<8x256xf32>
    %20 = arith.mulf %17, %19 : vector<8x256xf32>
    %c15_i32 = arith.constant 15 : i32
    %21 = tpu.dynamic_rotate %6 by %c15_i32 dim 1 : vector<8x256xf32>, i32 -> vector<8x256xf32>
    %22 = vector.extract_strided_slice %5 {offsets = [2, 0], sizes = [1, 256], strides = [1, 1]} : vector<9x256xf32> to vector<1x256xf32>
    %23 = vector.broadcast %22 : vector<1x256xf32> to vector<8x256xf32>
    %24 = arith.mulf %21, %23 : vector<8x256xf32>
    %c1_i32_8 = arith.constant 1 : i32
    %25 = tpu.dynamic_rotate %6 by %c1_i32_8 dim 1 : vector<8x256xf32>, i32 -> vector<8x256xf32>
    %26 = vector.extract_strided_slice %5 {offsets = [3, 0], sizes = [1, 256], strides = [1, 1]} : vector<9x256xf32> to vector<1x256xf32>
    %27 = vector.broadcast %26 : vector<1x256xf32> to vector<8x256xf32>
    %28 = arith.mulf %25, %27 : vector<8x256xf32>
    %c255_i32 = arith.constant 255 : i32
    %29 = tpu.dynamic_rotate %6 by %c255_i32 dim 1 : vector<8x256xf32>, i32 -> vector<8x256xf32>
    %30 = vector.extract_strided_slice %5 {offsets = [5, 0], sizes = [1, 256], strides = [1, 1]} : vector<9x256xf32> to vector<1x256xf32>
    %31 = vector.broadcast %30 : vector<1x256xf32> to vector<8x256xf32>
    %32 = arith.mulf %29, %31 : vector<8x256xf32>
    %c241_i32 = arith.constant 241 : i32
    %33 = tpu.dynamic_rotate %6 by %c241_i32 dim 1 : vector<8x256xf32>, i32 -> vector<8x256xf32>
    %34 = vector.extract_strided_slice %5 {offsets = [6, 0], sizes = [1, 256], strides = [1, 1]} : vector<9x256xf32> to vector<1x256xf32>
    %35 = vector.broadcast %34 : vector<1x256xf32> to vector<8x256xf32>
    %36 = arith.mulf %33, %35 : vector<8x256xf32>
    %c240_i32 = arith.constant 240 : i32
    %37 = tpu.dynamic_rotate %6 by %c240_i32 dim 1 : vector<8x256xf32>, i32 -> vector<8x256xf32>
    %38 = vector.extract_strided_slice %5 {offsets = [7, 0], sizes = [1, 256], strides = [1, 1]} : vector<9x256xf32> to vector<1x256xf32>
    %39 = vector.broadcast %38 : vector<1x256xf32> to vector<8x256xf32>
    %40 = arith.mulf %37, %39 : vector<8x256xf32>
    %c239_i32 = arith.constant 239 : i32
    %41 = tpu.dynamic_rotate %6 by %c239_i32 dim 1 : vector<8x256xf32>, i32 -> vector<8x256xf32>
    %42 = vector.extract_strided_slice %5 {offsets = [8, 0], sizes = [1, 256], strides = [1, 1]} : vector<9x256xf32> to vector<1x256xf32>
    %43 = vector.broadcast %42 : vector<1x256xf32> to vector<8x256xf32>
    %44 = arith.mulf %41, %43 : vector<8x256xf32>
    %45 = tpu.concatenate %16, %20, %24, %28, %6, %32, %36, %40, %44 in 0 : vector<8x256xf32>, vector<8x256xf32>, vector<8x256xf32>, vector<8x256xf32>, vector<8x256xf32>, vector<8x256xf32>, vector<8x256xf32>, vector<8x256xf32>, vector<8x256xf32> -> vector<72x256xf32>
    %cst = arith.constant dense<0.000000e+00> : vector<8x256xf32>
    %46 = tpu.matmul %3, %45, %cst {dimension_numbers = #tpu.dot_dimension_numbers<[1], [0], [0], [1], [0, 0, 1, 1], [], []>} : vector<8x72xf32>, vector<72x256xf32>, vector<8x256xf32> -> vector<8x256xf32>
    %47 = arith.addf %46, %4 : vector<8x256xf32>
    %48 = vector.broadcast %12 : f32 to vector<8x256xf32>
    %49 = arith.mulf %48, %47 : vector<8x256xf32>
    %cst_9 = arith.constant 0.333333343 : f32
    %50 = vector.broadcast %cst_9 : f32 to vector<8x256xf32>
    %51 = arith.mulf %49, %50 : vector<8x256xf32>
    %52 = arith.addf %6, %51 : vector<8x256xf32>
    %c17_i32_10 = arith.constant 17 : i32
    %53 = tpu.dynamic_rotate %52 by %c17_i32_10 dim 1 : vector<8x256xf32>, i32 -> vector<8x256xf32>
    %54 = vector.extract_strided_slice %5 {offsets = [0, 0], sizes = [1, 256], strides = [1, 1]} : vector<9x256xf32> to vector<1x256xf32>
    %55 = vector.broadcast %54 : vector<1x256xf32> to vector<8x256xf32>
    %56 = arith.mulf %53, %55 : vector<8x256xf32>
    %c16_i32_11 = arith.constant 16 : i32
    %57 = tpu.dynamic_rotate %52 by %c16_i32_11 dim 1 : vector<8x256xf32>, i32 -> vector<8x256xf32>
    %58 = vector.extract_strided_slice %5 {offsets = [1, 0], sizes = [1, 256], strides = [1, 1]} : vector<9x256xf32> to vector<1x256xf32>
    %59 = vector.broadcast %58 : vector<1x256xf32> to vector<8x256xf32>
    %60 = arith.mulf %57, %59 : vector<8x256xf32>
    %c15_i32_12 = arith.constant 15 : i32
    %61 = tpu.dynamic_rotate %52 by %c15_i32_12 dim 1 : vector<8x256xf32>, i32 -> vector<8x256xf32>
    %62 = vector.extract_strided_slice %5 {offsets = [2, 0], sizes = [1, 256], strides = [1, 1]} : vector<9x256xf32> to vector<1x256xf32>
    %63 = vector.broadcast %62 : vector<1x256xf32> to vector<8x256xf32>
    %64 = arith.mulf %61, %63 : vector<8x256xf32>
    %c1_i32_13 = arith.constant 1 : i32
    %65 = tpu.dynamic_rotate %52 by %c1_i32_13 dim 1 : vector<8x256xf32>, i32 -> vector<8x256xf32>
    %66 = vector.extract_strided_slice %5 {offsets = [3, 0], sizes = [1, 256], strides = [1, 1]} : vector<9x256xf32> to vector<1x256xf32>
    %67 = vector.broadcast %66 : vector<1x256xf32> to vector<8x256xf32>
    %68 = arith.mulf %65, %67 : vector<8x256xf32>
    %c255_i32_14 = arith.constant 255 : i32
    %69 = tpu.dynamic_rotate %52 by %c255_i32_14 dim 1 : vector<8x256xf32>, i32 -> vector<8x256xf32>
    %70 = vector.extract_strided_slice %5 {offsets = [5, 0], sizes = [1, 256], strides = [1, 1]} : vector<9x256xf32> to vector<1x256xf32>
    %71 = vector.broadcast %70 : vector<1x256xf32> to vector<8x256xf32>
    %72 = arith.mulf %69, %71 : vector<8x256xf32>
    %c241_i32_15 = arith.constant 241 : i32
    %73 = tpu.dynamic_rotate %52 by %c241_i32_15 dim 1 : vector<8x256xf32>, i32 -> vector<8x256xf32>
    %74 = vector.extract_strided_slice %5 {offsets = [6, 0], sizes = [1, 256], strides = [1, 1]} : vector<9x256xf32> to vector<1x256xf32>
    %75 = vector.broadcast %74 : vector<1x256xf32> to vector<8x256xf32>
    %76 = arith.mulf %73, %75 : vector<8x256xf32>
    %c240_i32_16 = arith.constant 240 : i32
    %77 = tpu.dynamic_rotate %52 by %c240_i32_16 dim 1 : vector<8x256xf32>, i32 -> vector<8x256xf32>
    %78 = vector.extract_strided_slice %5 {offsets = [7, 0], sizes = [1, 256], strides = [1, 1]} : vector<9x256xf32> to vector<1x256xf32>
    %79 = vector.broadcast %78 : vector<1x256xf32> to vector<8x256xf32>
    %80 = arith.mulf %77, %79 : vector<8x256xf32>
    %c239_i32_17 = arith.constant 239 : i32
    %81 = tpu.dynamic_rotate %52 by %c239_i32_17 dim 1 : vector<8x256xf32>, i32 -> vector<8x256xf32>
    %82 = vector.extract_strided_slice %5 {offsets = [8, 0], sizes = [1, 256], strides = [1, 1]} : vector<9x256xf32> to vector<1x256xf32>
    %83 = vector.broadcast %82 : vector<1x256xf32> to vector<8x256xf32>
    %84 = arith.mulf %81, %83 : vector<8x256xf32>
    %85 = tpu.concatenate %56, %60, %64, %68, %52, %72, %76, %80, %84 in 0 : vector<8x256xf32>, vector<8x256xf32>, vector<8x256xf32>, vector<8x256xf32>, vector<8x256xf32>, vector<8x256xf32>, vector<8x256xf32>, vector<8x256xf32>, vector<8x256xf32> -> vector<72x256xf32>
    %cst_18 = arith.constant dense<0.000000e+00> : vector<8x256xf32>
    %86 = tpu.matmul %3, %85, %cst_18 {dimension_numbers = #tpu.dot_dimension_numbers<[1], [0], [0], [1], [0, 0, 1, 1], [], []>} : vector<8x72xf32>, vector<72x256xf32>, vector<8x256xf32> -> vector<8x256xf32>
    %87 = arith.addf %86, %4 : vector<8x256xf32>
    %cst_19 = arith.constant 0.333333343 : f32
    %88 = vector.broadcast %cst_19 : f32 to vector<8x256xf32>
    %89 = arith.mulf %47, %88 : vector<8x256xf32>
    %90 = arith.subf %87, %89 : vector<8x256xf32>
    %91 = vector.broadcast %12 : f32 to vector<8x256xf32>
    %92 = arith.mulf %91, %90 : vector<8x256xf32>
    %93 = arith.addf %6, %92 : vector<8x256xf32>
    %c17_i32_20 = arith.constant 17 : i32
    %94 = tpu.dynamic_rotate %93 by %c17_i32_20 dim 1 : vector<8x256xf32>, i32 -> vector<8x256xf32>
    %95 = vector.extract_strided_slice %5 {offsets = [0, 0], sizes = [1, 256], strides = [1, 1]} : vector<9x256xf32> to vector<1x256xf32>
    %96 = vector.broadcast %95 : vector<1x256xf32> to vector<8x256xf32>
    %97 = arith.mulf %94, %96 : vector<8x256xf32>
    %c16_i32_21 = arith.constant 16 : i32
    %98 = tpu.dynamic_rotate %93 by %c16_i32_21 dim 1 : vector<8x256xf32>, i32 -> vector<8x256xf32>
    %99 = vector.extract_strided_slice %5 {offsets = [1, 0], sizes = [1, 256], strides = [1, 1]} : vector<9x256xf32> to vector<1x256xf32>
    %100 = vector.broadcast %99 : vector<1x256xf32> to vector<8x256xf32>
    %101 = arith.mulf %98, %100 : vector<8x256xf32>
    %c15_i32_22 = arith.constant 15 : i32
    %102 = tpu.dynamic_rotate %93 by %c15_i32_22 dim 1 : vector<8x256xf32>, i32 -> vector<8x256xf32>
    %103 = vector.extract_strided_slice %5 {offsets = [2, 0], sizes = [1, 256], strides = [1, 1]} : vector<9x256xf32> to vector<1x256xf32>
    %104 = vector.broadcast %103 : vector<1x256xf32> to vector<8x256xf32>
    %105 = arith.mulf %102, %104 : vector<8x256xf32>
    %c1_i32_23 = arith.constant 1 : i32
    %106 = tpu.dynamic_rotate %93 by %c1_i32_23 dim 1 : vector<8x256xf32>, i32 -> vector<8x256xf32>
    %107 = vector.extract_strided_slice %5 {offsets = [3, 0], sizes = [1, 256], strides = [1, 1]} : vector<9x256xf32> to vector<1x256xf32>
    %108 = vector.broadcast %107 : vector<1x256xf32> to vector<8x256xf32>
    %109 = arith.mulf %106, %108 : vector<8x256xf32>
    %c255_i32_24 = arith.constant 255 : i32
    %110 = tpu.dynamic_rotate %93 by %c255_i32_24 dim 1 : vector<8x256xf32>, i32 -> vector<8x256xf32>
    %111 = vector.extract_strided_slice %5 {offsets = [5, 0], sizes = [1, 256], strides = [1, 1]} : vector<9x256xf32> to vector<1x256xf32>
    %112 = vector.broadcast %111 : vector<1x256xf32> to vector<8x256xf32>
    %113 = arith.mulf %110, %112 : vector<8x256xf32>
    %c241_i32_25 = arith.constant 241 : i32
    %114 = tpu.dynamic_rotate %93 by %c241_i32_25 dim 1 : vector<8x256xf32>, i32 -> vector<8x256xf32>
    %115 = vector.extract_strided_slice %5 {offsets = [6, 0], sizes = [1, 256], strides = [1, 1]} : vector<9x256xf32> to vector<1x256xf32>
    %116 = vector.broadcast %115 : vector<1x256xf32> to vector<8x256xf32>
    %117 = arith.mulf %114, %116 : vector<8x256xf32>
    %c240_i32_26 = arith.constant 240 : i32
    %118 = tpu.dynamic_rotate %93 by %c240_i32_26 dim 1 : vector<8x256xf32>, i32 -> vector<8x256xf32>
    %119 = vector.extract_strided_slice %5 {offsets = [7, 0], sizes = [1, 256], strides = [1, 1]} : vector<9x256xf32> to vector<1x256xf32>
    %120 = vector.broadcast %119 : vector<1x256xf32> to vector<8x256xf32>
    %121 = arith.mulf %118, %120 : vector<8x256xf32>
    %c239_i32_27 = arith.constant 239 : i32
    %122 = tpu.dynamic_rotate %93 by %c239_i32_27 dim 1 : vector<8x256xf32>, i32 -> vector<8x256xf32>
    %123 = vector.extract_strided_slice %5 {offsets = [8, 0], sizes = [1, 256], strides = [1, 1]} : vector<9x256xf32> to vector<1x256xf32>
    %124 = vector.broadcast %123 : vector<1x256xf32> to vector<8x256xf32>
    %125 = arith.mulf %122, %124 : vector<8x256xf32>
    %126 = tpu.concatenate %97, %101, %105, %109, %93, %113, %117, %121, %125 in 0 : vector<8x256xf32>, vector<8x256xf32>, vector<8x256xf32>, vector<8x256xf32>, vector<8x256xf32>, vector<8x256xf32>, vector<8x256xf32>, vector<8x256xf32>, vector<8x256xf32> -> vector<72x256xf32>
    %cst_28 = arith.constant dense<0.000000e+00> : vector<8x256xf32>
    %127 = tpu.matmul %3, %126, %cst_28 {dimension_numbers = #tpu.dot_dimension_numbers<[1], [0], [0], [1], [0, 0, 1, 1], [], []>} : vector<8x72xf32>, vector<72x256xf32>, vector<8x256xf32> -> vector<8x256xf32>
    %128 = arith.addf %127, %4 : vector<8x256xf32>
    %129 = arith.subf %47, %87 : vector<8x256xf32>
    %130 = arith.addf %129, %128 : vector<8x256xf32>
    %131 = vector.broadcast %12 : f32 to vector<8x256xf32>
    %132 = arith.mulf %131, %130 : vector<8x256xf32>
    %133 = arith.addf %6, %132 : vector<8x256xf32>
    %c17_i32_29 = arith.constant 17 : i32
    %134 = tpu.dynamic_rotate %133 by %c17_i32_29 dim 1 : vector<8x256xf32>, i32 -> vector<8x256xf32>
    %135 = vector.extract_strided_slice %5 {offsets = [0, 0], sizes = [1, 256], strides = [1, 1]} : vector<9x256xf32> to vector<1x256xf32>
    %136 = vector.broadcast %135 : vector<1x256xf32> to vector<8x256xf32>
    %137 = arith.mulf %134, %136 : vector<8x256xf32>
    %c16_i32_30 = arith.constant 16 : i32
    %138 = tpu.dynamic_rotate %133 by %c16_i32_30 dim 1 : vector<8x256xf32>, i32 -> vector<8x256xf32>
    %139 = vector.extract_strided_slice %5 {offsets = [1, 0], sizes = [1, 256], strides = [1, 1]} : vector<9x256xf32> to vector<1x256xf32>
    %140 = vector.broadcast %139 : vector<1x256xf32> to vector<8x256xf32>
    %141 = arith.mulf %138, %140 : vector<8x256xf32>
    %c15_i32_31 = arith.constant 15 : i32
    %142 = tpu.dynamic_rotate %133 by %c15_i32_31 dim 1 : vector<8x256xf32>, i32 -> vector<8x256xf32>
    %143 = vector.extract_strided_slice %5 {offsets = [2, 0], sizes = [1, 256], strides = [1, 1]} : vector<9x256xf32> to vector<1x256xf32>
    %144 = vector.broadcast %143 : vector<1x256xf32> to vector<8x256xf32>
    %145 = arith.mulf %142, %144 : vector<8x256xf32>
    %c1_i32_32 = arith.constant 1 : i32
    %146 = tpu.dynamic_rotate %133 by %c1_i32_32 dim 1 : vector<8x256xf32>, i32 -> vector<8x256xf32>
    %147 = vector.extract_strided_slice %5 {offsets = [3, 0], sizes = [1, 256], strides = [1, 1]} : vector<9x256xf32> to vector<1x256xf32>
    %148 = vector.broadcast %147 : vector<1x256xf32> to vector<8x256xf32>
    %149 = arith.mulf %146, %148 : vector<8x256xf32>
    %c255_i32_33 = arith.constant 255 : i32
    %150 = tpu.dynamic_rotate %133 by %c255_i32_33 dim 1 : vector<8x256xf32>, i32 -> vector<8x256xf32>
    %151 = vector.extract_strided_slice %5 {offsets = [5, 0], sizes = [1, 256], strides = [1, 1]} : vector<9x256xf32> to vector<1x256xf32>
    %152 = vector.broadcast %151 : vector<1x256xf32> to vector<8x256xf32>
    %153 = arith.mulf %150, %152 : vector<8x256xf32>
    %c241_i32_34 = arith.constant 241 : i32
    %154 = tpu.dynamic_rotate %133 by %c241_i32_34 dim 1 : vector<8x256xf32>, i32 -> vector<8x256xf32>
    %155 = vector.extract_strided_slice %5 {offsets = [6, 0], sizes = [1, 256], strides = [1, 1]} : vector<9x256xf32> to vector<1x256xf32>
    %156 = vector.broadcast %155 : vector<1x256xf32> to vector<8x256xf32>
    %157 = arith.mulf %154, %156 : vector<8x256xf32>
    %c240_i32_35 = arith.constant 240 : i32
    %158 = tpu.dynamic_rotate %133 by %c240_i32_35 dim 1 : vector<8x256xf32>, i32 -> vector<8x256xf32>
    %159 = vector.extract_strided_slice %5 {offsets = [7, 0], sizes = [1, 256], strides = [1, 1]} : vector<9x256xf32> to vector<1x256xf32>
    %160 = vector.broadcast %159 : vector<1x256xf32> to vector<8x256xf32>
    %161 = arith.mulf %158, %160 : vector<8x256xf32>
    %c239_i32_36 = arith.constant 239 : i32
    %162 = tpu.dynamic_rotate %133 by %c239_i32_36 dim 1 : vector<8x256xf32>, i32 -> vector<8x256xf32>
    %163 = vector.extract_strided_slice %5 {offsets = [8, 0], sizes = [1, 256], strides = [1, 1]} : vector<9x256xf32> to vector<1x256xf32>
    %164 = vector.broadcast %163 : vector<1x256xf32> to vector<8x256xf32>
    %165 = arith.mulf %162, %164 : vector<8x256xf32>
    %166 = tpu.concatenate %137, %141, %145, %149, %133, %153, %157, %161, %165 in 0 : vector<8x256xf32>, vector<8x256xf32>, vector<8x256xf32>, vector<8x256xf32>, vector<8x256xf32>, vector<8x256xf32>, vector<8x256xf32>, vector<8x256xf32>, vector<8x256xf32> -> vector<72x256xf32>
    %cst_37 = arith.constant dense<0.000000e+00> : vector<8x256xf32>
    %167 = tpu.matmul %3, %166, %cst_37 {dimension_numbers = #tpu.dot_dimension_numbers<[1], [0], [0], [1], [0, 0, 1, 1], [], []>} : vector<8x72xf32>, vector<72x256xf32>, vector<8x256xf32> -> vector<8x256xf32>
    %168 = arith.addf %167, %4 : vector<8x256xf32>
    %169 = arith.addf %87, %128 : vector<8x256xf32>
    %cst_38 = arith.constant 3.000000e+00 : f32
    %170 = vector.broadcast %cst_38 : f32 to vector<8x256xf32>
    %171 = arith.mulf %170, %169 : vector<8x256xf32>
    %172 = arith.addf %47, %171 : vector<8x256xf32>
    %173 = arith.addf %172, %168 : vector<8x256xf32>
    %174 = vector.broadcast %12 : f32 to vector<8x256xf32>
    %175 = arith.mulf %174, %173 : vector<8x256xf32>
    %cst_39 = arith.constant 1.250000e-01 : f32
    %176 = vector.broadcast %cst_39 : f32 to vector<8x256xf32>
    %177 = arith.mulf %175, %176 : vector<8x256xf32>
    %178 = arith.addf %6, %177 : vector<8x256xf32>
    %c0_40 = arith.constant 0 : index
    %c0_41 = arith.constant 0 : index
    %179 = vector.load %arg7[%c0_40, %c0_41] : memref<8x256xf32, #tpu.memory_space<vmem>>, vector<8x256xf32>
    tpu.vector_store %arg7[%c0_40, %c0_41], %178 {strides = array<i32>} : memref<8x256xf32, #tpu.memory_space<vmem>>, vector<8x256xf32>,
    %c0_42 = arith.constant 0 : index
    %c0_43 = arith.constant 0 : index
    %c0_44 = arith.constant 0 : index
    %180 = vector.load %arg6[%c0_42, %c0_43, %c0_44] : memref<1x8x256xf32, #tpu.memory_space<vmem>>, vector<1x8x256xf32>
    %181 = vector.shape_cast %180 : vector<1x8x256xf32> to vector<8x256xf32>
    %182 = vector.shape_cast %178 : vector<8x256xf32> to vector<1x8x256xf32>
    tpu.vector_store %arg6[%c0_42, %c0_43, %c0_44], %182 {strides = array<i32>} : memref<1x8x256xf32, #tpu.memory_space<vmem>>, vector<1x8x256xf32>,
    return
  }
  func.func @transform_0(%arg0: i32, %arg1: memref<8xf32, #tpu.memory_space<smem>>) -> (i32, i32) {
    %c0_i32 = arith.constant 0 : i32
    %c0_i32_0 = arith.constant 0 : i32
    %c0_i32_1 = arith.constant 0 : i32
    return %c0_i32, %c0_i32_0 : i32, i32
  }
  func.func @transform_1(%arg0: i32, %arg1: memref<8xf32, #tpu.memory_space<smem>>) -> (i32, i32) {
    %c0_i32 = arith.constant 0 : i32
    %c0_i32_0 = arith.constant 0 : i32
    %c0_i32_1 = arith.constant 0 : i32
    return %c0_i32, %c0_i32_0 : i32, i32
  }
  func.func @transform_2(%arg0: i32, %arg1: memref<8xf32, #tpu.memory_space<smem>>) -> (i32, i32) {
    %c0_i32 = arith.constant 0 : i32
    %c0_i32_0 = arith.constant 0 : i32
    %c0_i32_1 = arith.constant 0 : i32
    return %c0_i32, %c0_i32_0 : i32, i32
  }
  func.func @transform_3(%arg0: i32, %arg1: memref<8xf32, #tpu.memory_space<smem>>) -> (i32, i32) {
    %c0_i32 = arith.constant 0 : i32
    %c0_i32_0 = arith.constant 0 : i32
    %c0_i32_1 = arith.constant 0 : i32
    return %c0_i32, %c0_i32_0 : i32, i32
  }
  func.func @transform_4(%arg0: i32, %arg1: memref<8xf32, #tpu.memory_space<smem>>) -> (i32, i32, i32) {
    %c0_i32 = arith.constant 0 : i32
    %c0_i32_0 = arith.constant 0 : i32
    %c0_i32_1 = arith.constant 0 : i32
    return %arg0, %c0_i32, %c0_i32_0 : i32, i32, i32
  }
}

</mosaic_0001>

<llo_original>
// kernel: tpu_custom_call.1
$region0: #{tpu_custom_call.1}
  #allocation0 [shape = 'u32[]', space=smem, size = 0x4, offset = 0x4, fixed_abs, tag = 'smem constant byte address 0x4 - core index']
  #allocation1 [shape = 'u32[144,128]{1,0:T(1,128)}', space=vmem, size = 0x12000, scoped, tag = 'internal scratch']
  #allocation2 [shape = 'f32[8,256]{1,0:T(8,128)}', space=vmem, size = 0x2000, scoped, tag = 'scratch operand']
  #allocation3 [shape = 's32[1]{0}', space=sflag, size = 0x4, scoped, tag = 'scoped memory for tpu_custom_call.1']
  #allocation4 [shape = 'u8[512]{0}', space=smem, size = 0x200, scoped, tag = 'prefetched SMEM operand 0']
  %s0 = inlined_call_operand.hbm [shape: f32[8], index: 0, kind: input, shape index: {}]
  %s1 = inlined_call_operand.hbm [shape: f32[8,256], index: 1, kind: input, shape index: {}]
  %s2 = inlined_call_operand.hbm [shape: f32[8,72], index: 2, kind: input, shape index: {}]
  %s3 = inlined_call_operand.hbm [shape: f32[8,256], index: 3, kind: input, shape index: {}]
  %s4 = inlined_call_operand.hbm [shape: f32[9,256], index: 4, kind: input, shape index: {}]
  %s5 = inlined_call_operand.hbm [shape: f32[7,8,256], index: 5, kind: output, shape index: {}]
  %s6 = sld [smem:[#allocation0]]
  $region69: #{tpu_custom_call.1} parent=0
    _
  %s8 = ssub.s32 1, %s6
  %s9 = scalar_select 0, %s8, %s6
  %11 = dma.hbm_to_smem %s0, 16, [#allocation4], [#allocation3]
  %12 = dma.done [#allocation3], 16
  %13 = sfence
  $region1: #{tpu_custom_call.1} parent=0
    #allocation5 [shape = 'u8[8192]{0}', space=vmem, size = 0x2000, scoped, tag = 'input window, operand 1, single buffered']
    #allocation6 [shape = 's32[2]{0}', space=sflag, size = 0x8, scoped, tag = 'scoped memory for tpu_custom_call.1']
    #allocation7 [shape = 's32[2]{0}', space=sflag, size = 0x8, scoped, tag = 'scoped memory for tpu_custom_call.1']
    #allocation8 [shape = 'u8[4096]{0}', space=vmem, size = 0x1000, scoped, tag = 'input window, operand 2, single buffered']
    #allocation9 [shape = 's32[1]{0}', space=sflag, size = 0x4, scoped, tag = 'scoped memory for tpu_custom_call.1']
    #allocation10 [shape = 'u8[8192]{0}', space=vmem, size = 0x2000, scoped, tag = 'input window, operand 3, single buffered']
    #allocation11 [shape = 'u8[16384]{0}', space=vmem, size = 0x4000, scoped, tag = 'input window, operand 4, single buffered']
    #allocation12 [shape = 's32[1]{0}', space=sflag, size = 0x4, scoped, tag = 'scoped memory for tpu_custom_call.1']
    #allocation13 [shape = 'u8[16384]{0}', space=vmem, size = 0x4000, scoped, tag = 'output window, operand 0']
    %14 = vsyncpa [#allocation6], 0
    %15 = vsyncpa [#allocation9], 0
    %16 = vsyncpa [#allocation12], 0
    %17 = vsyncpa [#allocation7], 0
    %s18 = scalar_lea.sflag [#allocation7], 1
    %19 = vsyncpa %s18, 0
    loop: start=0, step=1, limit=9
    $region2: #{tpu_custom_call.1} parent=1 // loop_pre_header
      _
    $region3: #{tpu_custom_call.1} parent=1 // loop_header
      %s21 = sphi 0, %s25
      %p22 = scmp.ge.s32.totalorder %s21, 9
      %s29 = sphi 0, %s29
      %s31 = sphi 0, %s29
      %s32 = sphi 0, %s31
      %s46 = sphi 0, %s32
      %s50 = sphi 0, %s50
      %s52 = sphi 0, %s50
      %s53 = sphi 0, %s52
      %s67 = sphi 0, %s53
      %s71 = sphi 0, %s71
      %s73 = sphi 0, %s71
      %s74 = sphi 0, %s73
      %s88 = sphi 0, %s74
      %s92 = sphi 0, %s92
      %s94 = sphi 0, %s92
      %s95 = sphi 0, %s94
      %s109 = sphi 0, %s95
      %s115 = sphi 0, %s117
      %s118 = sphi 0, %s115
      %s119 = sphi 0, %s118
      %s135 = sphi 0, %s119
    $region4: #{tpu_custom_call.1} parent=1 // loop_header_branch
      %24 = sbr.rel (%p22) target = $region8
    $region5: #{tpu_custom_call.1} parent=1 // loop_body
      %s26 = ssub.s32 %s21, 1
      %s27 = ssub.s32 %s21, 2
      %s28 = sadd.s32 %s21, 1
      %s30 = sadd.s32 %s29, 1
      %p33 = scmp.eq.s32.totalorder %s21, 6
      %p34 = scmp.ne.s32.totalorder %s29, %s31
      %p35 = scmp.eq.s32.totalorder %s21, 0
      %p36 = por %p34, %p35
      %p37 = scmp.ne.s32.totalorder %s29, %s31
      %p38 = scmp.eq.s32.totalorder %s26, 6
      %p39 = por %p37, %p38
      %p40 = scmp.ne.s32.totalorder %s31, %s32
      %p41 = scmp.eq.s32.totalorder %s26, 0
      %p42 = por %p40, %p41
      %p43 = scmp.ne.s32.totalorder %s31, %s32
      %p44 = scmp.eq.s32.totalorder %s27, 6
      %p45 = por %p43, %p44
      %p47 = scmp.ne.s32.totalorder %s32, %s46
      %p48 = scmp.eq.s32.totalorder %s27, 0
      %p49 = por %p47, %p48
      %s51 = sadd.s32 %s50, 1
      %p54 = scmp.eq.s32.totalorder %s21, 6
      %p55 = scmp.ne.s32.totalorder %s50, %s52
      %p56 = scmp.eq.s32.totalorder %s21, 0
      %p57 = por %p55, %p56
      %p58 = scmp.ne.s32.totalorder %s50, %s52
      %p59 = scmp.eq.s32.totalorder %s26, 6
      %p60 = por %p58, %p59
      %p61 = scmp.ne.s32.totalorder %s52, %s53
      %p62 = scmp.eq.s32.totalorder %s26, 0
      %p63 = por %p61, %p62
      %p64 = scmp.ne.s32.totalorder %s52, %s53
      %p65 = scmp.eq.s32.totalorder %s27, 6
      %p66 = por %p64, %p65
      %p68 = scmp.ne.s32.totalorder %s53, %s67
      %p69 = scmp.eq.s32.totalorder %s27, 0
      %p70 = por %p68, %p69
      %s72 = sadd.s32 %s71, 1
      %p75 = scmp.eq.s32.totalorder %s21, 6
      %p76 = scmp.ne.s32.totalorder %s71, %s73
      %p77 = scmp.eq.s32.totalorder %s21, 0
      %p78 = por %p76, %p77
      %p79 = scmp.ne.s32.totalorder %s71, %s73
      %p80 = scmp.eq.s32.totalorder %s26, 6
      %p81 = por %p79, %p80
      %p82 = scmp.ne.s32.totalorder %s73, %s74
      %p83 = scmp.eq.s32.totalorder %s26, 0
      %p84 = por %p82, %p83
      %p85 = scmp.ne.s32.totalorder %s73, %s74
      %p86 = scmp.eq.s32.totalorder %s27, 6
      %p87 = por %p85, %p86
      %p89 = scmp.ne.s32.totalorder %s74, %s88
      %p90 = scmp.eq.s32.totalorder %s27, 0
      %p91 = por %p89, %p90
      %s93 = sadd.s32 %s92, 1
      %p96 = scmp.eq.s32.totalorder %s21, 6
      %p97 = scmp.ne.s32.totalorder %s92, %s94
      %p98 = scmp.eq.s32.totalorder %s21, 0
      %p99 = por %p97, %p98
      %p100 = scmp.ne.s32.totalorder %s92, %s94
      %p101 = scmp.eq.s32.totalorder %s26, 6
      %p102 = por %p100, %p101
      %p103 = scmp.ne.s32.totalorder %s94, %s95
      %p104 = scmp.eq.s32.totalorder %s26, 0
      %p105 = por %p103, %p104
      %p106 = scmp.ne.s32.totalorder %s94, %s95
      %p107 = scmp.eq.s32.totalorder %s27, 6
      %p108 = por %p106, %p107
      %p110 = scmp.ne.s32.totalorder %s95, %s109
      %p111 = scmp.eq.s32.totalorder %s27, 0
      %p112 = por %p110, %p111
      %s113 = ssub.s32 %s21, %s28
      %p114 = scmp.eq.s32.totalorder %s113, 0
      %s116 = sadd.s32 %s115, 1
      %s117 = scalar_select %p114, %s115, %s116
      %p120 = pneg %p114
      %p121 = scmp.eq.s32.totalorder %s21, 6
      %p122 = por %p120, %p121
      %p123 = scmp.ne.s32.totalorder %s115, %s118
      %p124 = scmp.eq.s32.totalorder %s21, 0
      %p125 = por %p123, %p124
      %p126 = scmp.ne.s32.totalorder %s115, %s118
      %p127 = scmp.eq.s32.totalorder %s26, 6
      %p128 = por %p126, %p127
      %p129 = scmp.ne.s32.totalorder %s118, %s119
      %p130 = scmp.eq.s32.totalorder %s26, 0
      %p131 = por %p129, %p130
      %p132 = scmp.ne.s32.totalorder %s118, %s119
      %p133 = scmp.eq.s32.totalorder %s27, 6
      %p134 = por %p132, %p133
      %p136 = scmp.ne.s32.totalorder %s119, %s135
      %p137 = scmp.eq.s32.totalorder %s27, 0
      %p138 = por %p136, %p137
      %p139 = scmp.le.s32.totalorder 1, %s21
      %p140 = scmp.lt.s32.totalorder %s21, 8
      %p141 = pnand %p139, %p140
      %p142 = pneg %p141
      // Predicated region
      $region9: #{tpu_custom_call.1} parent=5 // pred_check
        _
      $region10: #{tpu_custom_call.1} parent=5 // pred_check_branch
        %144 = sbr.rel (%p141) target = $region12
      $region11: #{tpu_custom_call.1} parent=5 // pred_region
        %s145 = ssub.s32 %s21, 1
        // Predicated region
        $region13: #{tpu_custom_call.1} parent=11 // pred_check
          %p146 = pneg %p42
        $region14: #{tpu_custom_call.1} parent=11 // pred_check_branch
          %148 = sbr.rel (%p146) target = $region16
        $region15: #{tpu_custom_call.1} parent=11 // pred_region
          %s150 = ssub.s32 256, 256
          %151 = vsyncadd [#allocation6], %s150
          %s153 = sshll.u32 [#allocation5], 4
          %s154 = int_to_ptr.vmem [resolvable:$true] %s153
          %156 = dma.hbm_to_vmem [thread:$0]  %s1, 256, %s154, [#allocation6]
        $region16: #{tpu_custom_call.1} parent=11 // pred_fallthru
          _
        // Predicated region
        $region17: #{tpu_custom_call.1} parent=11 // pred_check
          %p157 = pneg %p63
        $region18: #{tpu_custom_call.1} parent=11 // pred_check_branch
          %159 = sbr.rel (%p157) target = $region20
        $region19: #{tpu_custom_call.1} parent=11 // pred_region
          %s161 = ssub.s32 128, 128
          %162 = vsyncadd [#allocation9], %s161
          %s164 = sshll.u32 [#allocation8], 4
          %s165 = int_to_ptr.vmem [resolvable:$true] %s164
          %167 = dma.hbm_to_vmem [thread:$0]  %s2, 128, %s165, [#allocation9]
        $region20: #{tpu_custom_call.1} parent=11 // pred_fallthru
          _
        // Predicated region
        $region21: #{tpu_custom_call.1} parent=11 // pred_check
          %p168 = pneg %p84
        $region22: #{tpu_custom_call.1} parent=11 // pred_check_branch
          %170 = sbr.rel (%p168) target = $region24
        $region23: #{tpu_custom_call.1} parent=11 // pred_region
          %s172 = ssub.s32 256, 256
          %173 = vsyncadd [#allocation9], %s172
          %s175 = sshll.u32 [#allocation10], 4
          %s176 = int_to_ptr.vmem [resolvable:$true] %s175
          %178 = dma.hbm_to_vmem [thread:$0]  %s3, 256, %s176, [#allocation9]
        $region24: #{tpu_custom_call.1} parent=11 // pred_fallthru
          _
        // Predicated region
        $region25: #{tpu_custom_call.1} parent=11 // pred_check
          %p179 = pneg %p105
        $region26: #{tpu_custom_call.1} parent=11 // pred_check_branch
          %181 = sbr.rel (%p179) target = $region28
        $region27: #{tpu_custom_call.1} parent=11 // pred_region
          %s183 = ssub.s32 512, 512
          %184 = vsyncadd [#allocation12], %s183
          %s185 = sshll.u32 [#allocation11], 4
          %s186 = int_to_ptr.vmem [resolvable:$true] %s185
          %191 = dma.hbm_to_vmem [thread:$0]  %s4, 512, %s186, [#allocation12], 256, 256, 16
        $region28: #{tpu_custom_call.1} parent=11 // pred_fallthru
          _
      $region12: #{tpu_custom_call.1} parent=5 // pred_fallthru
        _
      %p192 = scmp.lt.s32.totalorder %s21, 7
      // Predicated region
      $region29: #{tpu_custom_call.1} parent=5 // pred_check
        %p193 = pneg %p192
      $region30: #{tpu_custom_call.1} parent=5 // pred_check_branch
        %195 = sbr.rel (%p193) target = $region32
      $region31: #{tpu_custom_call.1} parent=5 // pred_region
        _
      $region32: #{tpu_custom_call.1} parent=5 // pred_fallthru
        _
      %p196 = scmp.le.s32.totalorder 1, %s21
      %p197 = scmp.lt.s32.totalorder %s21, 8
      %p198 = pnand %p196, %p197
      %p199 = pneg %p198
      // Predicated region
      $region33: #{tpu_custom_call.1} parent=5 // pred_check
        _
      $region34: #{tpu_custom_call.1} parent=5 // pred_check_branch
        %201 = sbr.rel (%p198) target = $region36
      $region35: #{tpu_custom_call.1} parent=5 // pred_region
        %s202 = ssub.s32 %s21, 1
        // Predicated region
        $region37: #{tpu_custom_call.1} parent=35 // pred_check
          %p203 = pneg %p42
        $region38: #{tpu_custom_call.1} parent=35 // pred_check_branch
          %205 = sbr.rel (%p203) target = $region40
        $region39: #{tpu_custom_call.1} parent=35 // pred_region
          %206 = dma.done [#allocation6], 256
        $region40: #{tpu_custom_call.1} parent=35 // pred_fallthru
          _
        // Predicated region
        $region41: #{tpu_custom_call.1} parent=35 // pred_check
          %p207 = pneg %p63
        $region42: #{tpu_custom_call.1} parent=35 // pred_check_branch
          %209 = sbr.rel (%p207) target = $region44
        $region43: #{tpu_custom_call.1} parent=35 // pred_region
          %210 = dma.done [#allocation9], 128
        $region44: #{tpu_custom_call.1} parent=35 // pred_fallthru
          _
        // Predicated region
        $region45: #{tpu_custom_call.1} parent=35 // pred_check
          %p211 = pneg %p84
        $region46: #{tpu_custom_call.1} parent=35 // pred_check_branch
          %213 = sbr.rel (%p211) target = $region48
        $region47: #{tpu_custom_call.1} parent=35 // pred_region
          %214 = dma.done [#allocation9], 256
        $region48: #{tpu_custom_call.1} parent=35 // pred_fallthru
          _
        // Predicated region
        $region49: #{tpu_custom_call.1} parent=35 // pred_check
          %p215 = pneg %p105
        $region50: #{tpu_custom_call.1} parent=35 // pred_check_branch
          %217 = sbr.rel (%p215) target = $region52
        $region51: #{tpu_custom_call.1} parent=35 // pred_region
          %218 = dma.done [#allocation12], 512
        $region52: #{tpu_custom_call.1} parent=35 // pred_fallthru
          _
        %p219 = pneg %p42
        %p220 = pneg %p39
        %p221 = pneg %p63
        %p222 = pneg %p60
        %p223 = pneg %p84
        %p224 = pneg %p81
        %p225 = pneg %p105
        %p226 = pneg %p102
        %p227 = pneg %p131
        %p228 = pneg %p128
        %s229 = sand.u32 %s118, 1
        %s230 = scalar_lea.sflag [#allocation7], %s229
        %s231 = sand.u32 %s118, 1
        %s232 = smul.addr %s231, 16
        %s233 = scalar_lea.vmem [#allocation13], %s232
        %p234 = scmp.eq.s32.totalorder %s26, 0
        // Predicated region
        $region53: #{tpu_custom_call.1} parent=35 // pred_check
          %p235 = pneg %p234
        $region54: #{tpu_custom_call.1} parent=35 // pred_check_branch
          %237 = sbr.rel (%p235) target = $region56
        $region55: #{tpu_custom_call.1} parent=35 // pred_region
          %v238 = vld [vmem:[#allocation5] sm:$0xff]
          %v239 = vld [vmem:[#allocation5 + $0x8] sm:$0xff]
          %240 = vst [vmem:[#allocation2] sm:$0xff] %v238
          %241 = vst [vmem:[#allocation2 + $0x8] sm:$0xff] %v239
        $region56: #{tpu_custom_call.1} parent=35 // pred_fallthru
          _
        %v242 = vld [vmem:[#allocation8] sm:$0xff]
        %v243 = vld [vmem:[#allocation10] sm:$0xff]
        %v244 = vld [vmem:[#allocation10 + $0x8] sm:$0xff]
        %v245 = vld [vmem:[#allocation11] sm:$0xff]
        %v246 = vld [vmem:[#allocation11 + $0x8] sm:$0xff]
        %v247 = vld [vmem:[#allocation11 + $0x10] sm:$0x1]
        %v248 = vld [vmem:[#allocation11 + $0x18] sm:$0x1]
        %v249 = vld [vmem:[#allocation2] sm:$0xff]
        %v250 = vld [vmem:[#allocation2 + $0x8] sm:$0xff]
        %s251 = sadd.s32 %s26, 1
        %s252 = sld [smem:[#allocation4 + %s251]]
        %s253 = sld [smem:[#allocation4 + %s26]]
        %s254 = ssub.f32 %s252, %s253
        %255 = vrot.lane.b32.xlu0 %v249, 17
        %v256 = vpop.permute.xlu0 %255
        %257 = vrot.lane.b32.xlu0 %v250, 17
        %v258 = vpop.permute.xlu0 %257
        %v259 = vlaneseq
        %v260 = vand.u32 %v259, 127
        %vm261 = vcmp.lt.s32.totalorder %v260, 17
        %v262 = vsel %vm261, %v256, %v258
        %v263 = vsel %vm261, %v258, %v256
        %v264 = vlaneseq
        %v265 = vshrl.u32 %v264, 7
        %v266 = vsub.s32 0, %v265
        %v267 = vrot.slane %v245, %v266
        %v268 = vlaneseq
        %v269 = vshrl.u32 %v268, 7
        %v270 = vsub.s32 0, %v269
        %v271 = vrot.slane %v246, %v270
        %v272 = vmul.f32 %v263, %v267
        %v273 = vmul.f32 %v262, %v271
        %274 = vrot.lane.b32.xlu0 %v249, 16
        %v275 = vpop.permute.xlu0 %274
        %276 = vrot.lane.b32.xlu0 %v250, 16
        %v277 = vpop.permute.xlu0 %276
        %vm278 = vcmp.lt.s32.totalorder %v260, 16
        %v279 = vsel %vm278, %v275, %v277
        %v280 = vsel %vm278, %v277, %v275
        %v281 = vlaneseq
        %v282 = vshrl.u32 %v281, 7
        %v283 = vsub.s32 1, %v282
        %v284 = vrot.slane %v245, %v283
        %v285 = vlaneseq
        %v286 = vshrl.u32 %v285, 7
        %v287 = vsub.s32 1, %v286
        %v288 = vrot.slane %v246, %v287
        %v289 = vmul.f32 %v280, %v284
        %v290 = vmul.f32 %v279, %v288
        %291 = vrot.lane.b32.xlu0 %v249, 15
        %v292 = vpop.permute.xlu0 %291
        %293 = vrot.lane.b32.xlu0 %v250, 15
        %v294 = vpop.permute.xlu0 %293
        %vm295 = vcmp.lt.s32.totalorder %v260, 15
        %v296 = vsel %vm295, %v292, %v294
        %v297 = vsel %vm295, %v294, %v292
        %v298 = vlaneseq
        %v299 = vshrl.u32 %v298, 7
        %v300 = vsub.s32 2, %v299
        %v301 = vrot.slane %v245, %v300
        %v302 = vlaneseq
        %v303 = vshrl.u32 %v302, 7
        %v304 = vsub.s32 2, %v303
        %v305 = vrot.slane %v246, %v304
        %v306 = vmul.f32 %v297, %v301
        %v307 = vmul.f32 %v296, %v305
        %308 = vrot.lane.b32.xlu0 %v249, 1
        %v309 = vpop.permute.xlu0 %308
        %310 = vrot.lane.b32.xlu0 %v250, 1
        %v311 = vpop.permute.xlu0 %310
        %vm312 = vcmp.lt.s32.totalorder %v260, 1
        %v313 = vsel %vm312, %v309, %v311
        %v314 = vsel %vm312, %v311, %v309
        %v315 = vlaneseq
        %v316 = vshrl.u32 %v315, 7
        %v317 = vsub.s32 3, %v316
        %v318 = vrot.slane %v245, %v317
        %v319 = vlaneseq
        %v320 = vshrl.u32 %v319, 7
        %v321 = vsub.s32 3, %v320
        %v322 = vrot.slane %v246, %v321
        %v323 = vmul.f32 %v314, %v318
        %v324 = vmul.f32 %v313, %v322
        %325 = vrot.lane.b32.xlu0 %v249, 127
        %v326 = vpop.permute.xlu0 %325
        %327 = vrot.lane.b32.xlu0 %v250, 127
        %v328 = vpop.permute.xlu0 %327
        %vm329 = vcmp.lt.s32.totalorder %v260, 127
        %v330 = vsel %vm329, %v326, %v328
        %v331 = vsel %vm329, %v328, %v326
        %v332 = vlaneseq
        %v333 = vshrl.u32 %v332, 7
        %v334 = vsub.s32 5, %v333
        %v335 = vrot.slane %v245, %v334
        %v336 = vlaneseq
        %v337 = vshrl.u32 %v336, 7
        %v338 = vsub.s32 5, %v337
        %v339 = vrot.slane %v246, %v338
        %v340 = vmul.f32 %v330, %v335
        %v341 = vmul.f32 %v331, %v339
        %342 = vrot.lane.b32.xlu0 %v249, 113
        %v343 = vpop.permute.xlu0 %342
        %344 = vrot.lane.b32.xlu0 %v250, 113
        %v345 = vpop.permute.xlu0 %344
        %vm346 = vcmp.lt.s32.totalorder %v260, 113
        %v347 = vsel %vm346, %v343, %v345
        %v348 = vsel %vm346, %v345, %v343
        %v349 = vlaneseq
        %v350 = vshrl.u32 %v349, 7
        %v351 = vsub.s32 6, %v350
        %v352 = vrot.slane %v245, %v351
        %v353 = vlaneseq
        %v354 = vshrl.u32 %v353, 7
        %v355 = vsub.s32 6, %v354
        %v356 = vrot.slane %v246, %v355
        %v357 = vmul.f32 %v347, %v352
        %v358 = vmul.f32 %v348, %v356
        %359 = vrot.lane.b32.xlu0 %v249, 112
        %v360 = vpop.permute.xlu0 %359
        %361 = vrot.lane.b32.xlu0 %v250, 112
        %v362 = vpop.permute.xlu0 %361
        %vm363 = vcmp.lt.s32.totalorder %v260, 112
        %v364 = vsel %vm363, %v360, %v362
        %v365 = vsel %vm363, %v362, %v360
        %v366 = vlaneseq
        %v367 = vshrl.u32 %v366, 7
        %v368 = vsub.s32 7, %v367
        %v369 = vrot.slane %v245, %v368
        %v370 = vlaneseq
        %v371 = vshrl.u32 %v370, 7
        %v372 = vsub.s32 7, %v371
        %v373 = vrot.slane %v246, %v372
        %v374 = vmul.f32 %v364, %v369
        %v375 = vmul.f32 %v365, %v373
        %376 = vrot.lane.b32.xlu0 %v249, 111
        %v377 = vpop.permute.xlu0 %376
        %378 = vrot.lane.b32.xlu0 %v250, 111
        %v379 = vpop.permute.xlu0 %378
        %vm380 = vcmp.lt.s32.totalorder %v260, 111
        %v381 = vsel %vm380, %v377, %v379
        %v382 = vsel %vm380, %v379, %v377
        %v383 = vlaneseq
        %v384 = vshrl.u32 %v383, 7
        %v385 = vsub.s32 0, %v384
        %v386 = vrot.slane %v247, %v385
        %v387 = vlaneseq
        %v388 = vshrl.u32 %v387, 7
        %v389 = vsub.s32 0, %v388
        %v390 = vrot.slane %v248, %v389
        %v391 = vmul.f32 %v381, %v386
        %v392 = vmul.f32 %v382, %v390
        %vm393 = vcmask 588800
        %v395 = vsel %vm393, %v242, 0
        %397 = vmatprep.subr.mxu0 0.0
        %398 = vmatpush1.msra.mxu0 0.0
        %399 = vmatprep.subr.mxu0 0.0
        %400 = vmatpush1.msra.mxu0 0.0
        %401 = vmatprep.subr.mxu0 0.0
        %402 = vmatpush1.msra.mxu0 0.0
        %403 = vmatprep.subr.mxu0 0.0
        %404 = vmatpush1.msra.mxu0 0.0
        %405 = vmatprep.subr.mxu0 0.0
        %406 = vmatpush1.msra.mxu0 0.0
        %407 = vmatprep.subr.mxu0 0.0
        %408 = vmatpush1.msra.mxu0 0.0
        %409 = vmatprep.subr.mxu0 0.0
        %410 = vmatpush1.msra.mxu0 0.0
        %411 = vmatprep.subr.mxu0 %v392
        %412 = vmatpush1.msra.mxu0 %v391
        %413 = vmatprep.subr.mxu0 %v375
        %414 = vmatpush1.msra.mxu0 %v374
        %415 = vmatprep.subr.mxu0 %v358
        %416 = vmatpush1.msra.mxu0 %v357
        %417 = vmatprep.subr.mxu0 %v341
        %418 = vmatpush1.msra.mxu0 %v340
        %419 = vmatprep.subr.mxu0 %v250
        %420 = vmatpush1.msra.mxu0 %v249
        %421 = vmatprep.subr.mxu0 %v324
        %422 = vmatpush1.msra.mxu0 %v323
        %423 = vmatprep.subr.mxu0 %v307
        %424 = vmatpush1.msra.mxu0 %v306
        %425 = vmatprep.subr.mxu0 %v290
        %426 = vmatpush1.msra.mxu0 %v289
        %427 = vmatprep.subr.mxu0 %v273
        %428 = vmatpush1.msra.mxu0 %v272
        %429 = vmatprep.subr.mxu0 0.0
        %430 = vmatpush2.msra.mxu0 0.0
        %431 = vmatprep.subr.mxu0 0.0
        %432 = vmatpush2.msra.mxu0 0.0
        %433 = vmatprep.subr.mxu0 0.0
        %434 = vmatpush2.msra.mxu0 0.0
        %435 = vmatprep.subr.mxu0 0.0
        %436 = vmatpush2.msra.mxu0 0.0
        %437 = vmatprep.subr.mxu0 0.0
        %438 = vmatpush2.msra.mxu0 0.0
        %439 = vmatprep.subr.mxu0 0.0
        %440 = vmatpush2.msra.mxu0 0.0
        %441 = vmatprep.subr.mxu0 0.0
        %442 = vmatpush2.msra.mxu0 0.0
        %443 = vmatprep.subr.mxu0 0.0
        %444 = vmatpush2.msra.mxu0 0.0
        %445 = vmatprep.subr.mxu0 0.0
        %446 = vmatpush2.msra.mxu0 0.0
        %447 = vmatprep.subr.mxu0 0.0
        %448 = vmatpush2.msra.mxu0 0.0
        %449 = vmatprep.subr.mxu0 0.0
        %450 = vmatpush2.msra.mxu0 0.0
        %451 = vmatprep.subr.mxu0 0.0
        %452 = vmatpush2.msra.mxu0 0.0
        %453 = vmatprep.subr.mxu0 0.0
        %454 = vmatpush2.msra.mxu0 0.0
        %455 = vmatprep.subr.mxu0 0.0
        %456 = vmatpush2.msra.mxu0 0.0
        %457 = vmatprep.subr.mxu0 0.0
        %458 = vmatpush2.msra.mxu0 0.0
        %459 = vmatprep.subr.mxu0 0.0
        %460 = vmatpush2.msra.mxu0 0.0
        %461 = vmatprep.mubr.f32.mxu0 0.0
        %462 = vmatmul.mubr.f32.gmra.mxu0 %v395
        %v463 = vpop.f32.mrf.mxu0
        %v464 = vadd.f32 %v243, %v463
        %v465 = vpop.f32.mrf.mxu0
        %v466 = vadd.f32 %v244, %v465
        %467 = vdwg.mxu0
        %v468 = vstv %s254
        %v469 = vmul.f32 %v468, %v464
        %v470 = vmul.f32 %v468, %v466
        %v471 = vmul.f32 %v469, 0.33333334
        %v472 = vmul.f32 %v470, 0.33333334
        %v473 = vadd.f32 %v249, %v471
        %v474 = vadd.f32 %v250, %v472
        %475 = vrot.lane.b32.xlu0 %v473, 17
        %v476 = vpop.permute.xlu0 %475
        %477 = vrot.lane.b32.xlu0 %v474, 17
        %v478 = vpop.permute.xlu0 %477
        %v479 = vsel %vm261, %v476, %v478
        %v480 = vsel %vm261, %v478, %v476
        %v481 = vmul.f32 %v480, %v267
        %v482 = vmul.f32 %v479, %v271
        %483 = vrot.lane.b32.xlu0 %v473, 16
        %v484 = vpop.permute.xlu0 %483
        %485 = vrot.lane.b32.xlu0 %v474, 16
        %v486 = vpop.permute.xlu0 %485
        %v487 = vsel %vm278, %v484, %v486
        %v488 = vsel %vm278, %v486, %v484
        %v489 = vmul.f32 %v488, %v284
        %v490 = vmul.f32 %v487, %v288
        %491 = vrot.lane.b32.xlu0 %v473, 15
        %v492 = vpop.permute.xlu0 %491
        %493 = vrot.lane.b32.xlu0 %v474, 15
        %v494 = vpop.permute.xlu0 %493
        %v495 = vsel %vm295, %v492, %v494
        %v496 = vsel %vm295, %v494, %v492
        %v497 = vmul.f32 %v496, %v301
        %v498 = vmul.f32 %v495, %v305
        %499 = vrot.lane.b32.xlu0 %v473, 1
        %v500 = vpop.permute.xlu0 %499
        %501 = vrot.lane.b32.xlu0 %v474, 1
        %v502 = vpop.permute.xlu0 %501
        %v503 = vsel %vm312, %v500, %v502
        %v504 = vsel %vm312, %v502, %v500
        %v505 = vmul.f32 %v504, %v318
        %v506 = vmul.f32 %v503, %v322
        %507 = vrot.lane.b32.xlu0 %v473, 127
        %v508 = vpop.permute.xlu0 %507
        %509 = vrot.lane.b32.xlu0 %v474, 127
        %v510 = vpop.permute.xlu0 %509
        %v511 = vsel %vm329, %v508, %v510
        %v512 = vsel %vm329, %v510, %v508
        %v513 = vmul.f32 %v511, %v335
        %v514 = vmul.f32 %v512, %v339
        %515 = vrot.lane.b32.xlu0 %v473, 113
        %v516 = vpop.permute.xlu0 %515
        %517 = vrot.lane.b32.xlu0 %v474, 113
        %v518 = vpop.permute.xlu0 %517
        %v519 = vsel %vm346, %v516, %v518
        %v520 = vsel %vm346, %v518, %v516
        %v521 = vmul.f32 %v519, %v352
        %v522 = vmul.f32 %v520, %v356
        %523 = vrot.lane.b32.xlu0 %v473, 112
        %v524 = vpop.permute.xlu0 %523
        %525 = vrot.lane.b32.xlu0 %v474, 112
        %v526 = vpop.permute.xlu0 %525
        %v527 = vsel %vm363, %v524, %v526
        %v528 = vsel %vm363, %v526, %v524
        %v529 = vmul.f32 %v527, %v369
        %v530 = vmul.f32 %v528, %v373
        %531 = vrot.lane.b32.xlu0 %v473, 111
        %v532 = vpop.permute.xlu0 %531
        %533 = vrot.lane.b32.xlu0 %v474, 111
        %v534 = vpop.permute.xlu0 %533
        %v535 = vsel %vm380, %v532, %v534
        %v536 = vsel %vm380, %v534, %v532
        %v537 = vmul.f32 %v535, %v386
        %v538 = vmul.f32 %v536, %v390
        %539 = vmatprep.subr.mxu0 0.0
        %540 = vmatpush1.msra.mxu0 0.0
        %541 = vmatprep.subr.mxu0 0.0
        %542 = vmatpush1.msra.mxu0 0.0
        %543 = vmatprep.subr.mxu0 0.0
        %544 = vmatpush1.msra.mxu0 0.0
        %545 = vmatprep.subr.mxu0 0.0
        %546 = vmatpush1.msra.mxu0 0.0
        %547 = vmatprep.subr.mxu0 0.0
        %548 = vmatpush1.msra.mxu0 0.0
        %549 = vmatprep.subr.mxu0 0.0
        %550 = vmatpush1.msra.mxu0 0.0
        %551 = vmatprep.subr.mxu0 0.0
        %552 = vmatpush1.msra.mxu0 0.0
        %553 = vmatprep.subr.mxu0 %v538
        %554 = vmatpush1.msra.mxu0 %v537
        %555 = vmatprep.subr.mxu0 %v530
        %556 = vmatpush1.msra.mxu0 %v529
        %557 = vmatprep.subr.mxu0 %v522
        %558 = vmatpush1.msra.mxu0 %v521
        %559 = vmatprep.subr.mxu0 %v514
        %560 = vmatpush1.msra.mxu0 %v513
        %561 = vmatprep.subr.mxu0 %v474
        %562 = vmatpush1.msra.mxu0 %v473
        %563 = vmatprep.subr.mxu0 %v506
        %564 = vmatpush1.msra.mxu0 %v505
        %565 = vmatprep.subr.mxu0 %v498
        %566 = vmatpush1.msra.mxu0 %v497
        %567 = vmatprep.subr.mxu0 %v490
        %568 = vmatpush1.msra.mxu0 %v489
        %569 = vmatprep.subr.mxu0 %v482
        %570 = vmatpush1.msra.mxu0 %v481
        %571 = vmatprep.subr.mxu0 0.0
        %572 = vmatpush2.msra.mxu0 0.0
        %573 = vmatprep.subr.mxu0 0.0
        %574 = vmatpush2.msra.mxu0 0.0
        %575 = vmatprep.subr.mxu0 0.0
        %576 = vmatpush2.msra.mxu0 0.0
        %577 = vmatprep.subr.mxu0 0.0
        %578 = vmatpush2.msra.mxu0 0.0
        %579 = vmatprep.subr.mxu0 0.0
        %580 = vmatpush2.msra.mxu0 0.0
        %581 = vmatprep.subr.mxu0 0.0
        %582 = vmatpush2.msra.mxu0 0.0
        %583 = vmatprep.subr.mxu0 0.0
        %584 = vmatpush2.msra.mxu0 0.0
        %585 = vmatprep.subr.mxu0 0.0
        %586 = vmatpush2.msra.mxu0 0.0
        %587 = vmatprep.subr.mxu0 0.0
        %588 = vmatpush2.msra.mxu0 0.0
        %589 = vmatprep.subr.mxu0 0.0
        %590 = vmatpush2.msra.mxu0 0.0
        %591 = vmatprep.subr.mxu0 0.0
        %592 = vmatpush2.msra.mxu0 0.0
        %593 = vmatprep.subr.mxu0 0.0
        %594 = vmatpush2.msra.mxu0 0.0
        %595 = vmatprep.subr.mxu0 0.0
        %596 = vmatpush2.msra.mxu0 0.0
        %597 = vmatprep.subr.mxu0 0.0
        %598 = vmatpush2.msra.mxu0 0.0
        %599 = vmatprep.subr.mxu0 0.0
        %600 = vmatpush2.msra.mxu0 0.0
        %601 = vmatprep.subr.mxu0 0.0
        %602 = vmatpush2.msra.mxu0 0.0
        %603 = vmatprep.mubr.f32.mxu0 0.0
        %604 = vmatmul.mubr.f32.gmra.mxu0 %v395
        %v605 = vpop.f32.mrf.mxu0
        %v606 = vadd.f32 %v243, %v605
        %v607 = vpop.f32.mrf.mxu0
        %v608 = vadd.f32 %v244, %v607
        %609 = vdwg.mxu0
        %v610 = vmul.f32 %v464, 0.33333334
        %v611 = vmul.f32 %v466, 0.33333334
        %v612 = vsub.f32 %v606, %v610
        %v613 = vsub.f32 %v608, %v611
        %v614 = vmul.f32 %v468, %v612
        %v615 = vmul.f32 %v468, %v613
        %v616 = vadd.f32 %v249, %v614
        %v617 = vadd.f32 %v250, %v615
        %618 = vrot.lane.b32.xlu0 %v616, 17
        %v619 = vpop.permute.xlu0 %618
        %620 = vrot.lane.b32.xlu0 %v617, 17
        %v621 = vpop.permute.xlu0 %620
        %v622 = vsel %vm261, %v619, %v621
        %v623 = vsel %vm261, %v621, %v619
        %v624 = vmul.f32 %v623, %v267
        %v625 = vmul.f32 %v622, %v271
        %626 = vrot.lane.b32.xlu0 %v616, 16
        %v627 = vpop.permute.xlu0 %626
        %628 = vrot.lane.b32.xlu0 %v617, 16
        %v629 = vpop.permute.xlu0 %628
        %v630 = vsel %vm278, %v627, %v629
        %v631 = vsel %vm278, %v629, %v627
        %v632 = vmul.f32 %v631, %v284
        %v633 = vmul.f32 %v630, %v288
        %634 = vrot.lane.b32.xlu0 %v616, 15
        %v635 = vpop.permute.xlu0 %634
        %636 = vrot.lane.b32.xlu0 %v617, 15
        %v637 = vpop.permute.xlu0 %636
        %v638 = vsel %vm295, %v635, %v637
        %v639 = vsel %vm295, %v637, %v635
        %v640 = vmul.f32 %v639, %v301
        %v641 = vmul.f32 %v638, %v305
        %642 = vrot.lane.b32.xlu0 %v616, 1
        %v643 = vpop.permute.xlu0 %642
        %644 = vrot.lane.b32.xlu0 %v617, 1
        %v645 = vpop.permute.xlu0 %644
        %v646 = vsel %vm312, %v643, %v645
        %v647 = vsel %vm312, %v645, %v643
        %v648 = vmul.f32 %v647, %v318
        %v649 = vmul.f32 %v646, %v322
        %650 = vrot.lane.b32.xlu0 %v616, 127
        %v651 = vpop.permute.xlu0 %650
        %652 = vrot.lane.b32.xlu0 %v617, 127
        %v653 = vpop.permute.xlu0 %652
        %v654 = vsel %vm329, %v651, %v653
        %v655 = vsel %vm329, %v653, %v651
        %v656 = vmul.f32 %v654, %v335
        %v657 = vmul.f32 %v655, %v339
        %658 = vrot.lane.b32.xlu0 %v616, 113
        %v659 = vpop.permute.xlu0 %658
        %660 = vrot.lane.b32.xlu0 %v617, 113
        %v661 = vpop.permute.xlu0 %660
        %v662 = vsel %vm346, %v659, %v661
        %v663 = vsel %vm346, %v661, %v659
        %v664 = vmul.f32 %v662, %v352
        %v665 = vmul.f32 %v663, %v356
        %666 = vrot.lane.b32.xlu0 %v616, 112
        %v667 = vpop.permute.xlu0 %666
        %668 = vrot.lane.b32.xlu0 %v617, 112
        %v669 = vpop.permute.xlu0 %668
        %v670 = vsel %vm363, %v667, %v669
        %v671 = vsel %vm363, %v669, %v667
        %v672 = vmul.f32 %v670, %v369
        %v673 = vmul.f32 %v671, %v373
        %674 = vrot.lane.b32.xlu0 %v616, 111
        %v675 = vpop.permute.xlu0 %674
        %676 = vrot.lane.b32.xlu0 %v617, 111
        %v677 = vpop.permute.xlu0 %676
        %v678 = vsel %vm380, %v675, %v677
        %v679 = vsel %vm380, %v677, %v675
        %v680 = vmul.f32 %v678, %v386
        %v681 = vmul.f32 %v679, %v390
        %682 = vmatprep.subr.mxu0 0.0
        %683 = vmatpush1.msra.mxu0 0.0
        %684 = vmatprep.subr.mxu0 0.0
        %685 = vmatpush1.msra.mxu0 0.0
        %686 = vmatprep.subr.mxu0 0.0
        %687 = vmatpush1.msra.mxu0 0.0
        %688 = vmatprep.subr.mxu0 0.0
        %689 = vmatpush1.msra.mxu0 0.0
        %690 = vmatprep.subr.mxu0 0.0
        %691 = vmatpush1.msra.mxu0 0.0
        %692 = vmatprep.subr.mxu0 0.0
        %693 = vmatpush1.msra.mxu0 0.0
        %694 = vmatprep.subr.mxu0 0.0
        %695 = vmatpush1.msra.mxu0 0.0
        %696 = vmatprep.subr.mxu0 %v681
        %697 = vmatpush1.msra.mxu0 %v680
        %698 = vmatprep.subr.mxu0 %v673
        %699 = vmatpush1.msra.mxu0 %v672
        %700 = vmatprep.subr.mxu0 %v665
        %701 = vmatpush1.msra.mxu0 %v664
        %702 = vmatprep.subr.mxu0 %v657
        %703 = vmatpush1.msra.mxu0 %v656
        %704 = vmatprep.subr.mxu0 %v617
        %705 = vmatpush1.msra.mxu0 %v616
        %706 = vmatprep.subr.mxu0 %v649
        %707 = vmatpush1.msra.mxu0 %v648
        %708 = vmatprep.subr.mxu0 %v641
        %709 = vmatpush1.msra.mxu0 %v640
        %710 = vmatprep.subr.mxu0 %v633
        %711 = vmatpush1.msra.mxu0 %v632
        %712 = vmatprep.subr.mxu0 %v625
        %713 = vmatpush1.msra.mxu0 %v624
        %714 = vmatprep.subr.mxu0 0.0
        %715 = vmatpush2.msra.mxu0 0.0
        %716 = vmatprep.subr.mxu0 0.0
        %717 = vmatpush2.msra.mxu0 0.0
        %718 = vmatprep.subr.mxu0 0.0
        %719 = vmatpush2.msra.mxu0 0.0
        %720 = vmatprep.subr.mxu0 0.0
        %721 = vmatpush2.msra.mxu0 0.0
        %722 = vmatprep.subr.mxu0 0.0
        %723 = vmatpush2.msra.mxu0 0.0
        %724 = vmatprep.subr.mxu0 0.0
        %725 = vmatpush2.msra.mxu0 0.0
        %726 = vmatprep.subr.mxu0 0.0
        %727 = vmatpush2.msra.mxu0 0.0
        %728 = vmatprep.subr.mxu0 0.0
        %729 = vmatpush2.msra.mxu0 0.0
        %730 = vmatprep.subr.mxu0 0.0
        %731 = vmatpush2.msra.mxu0 0.0
        %732 = vmatprep.subr.mxu0 0.0
        %733 = vmatpush2.msra.mxu0 0.0
        %734 = vmatprep.subr.mxu0 0.0
        %735 = vmatpush2.msra.mxu0 0.0
        %736 = vmatprep.subr.mxu0 0.0
        %737 = vmatpush2.msra.mxu0 0.0
        %738 = vmatprep.subr.mxu0 0.0
        %739 = vmatpush2.msra.mxu0 0.0
        %740 = vmatprep.subr.mxu0 0.0
        %741 = vmatpush2.msra.mxu0 0.0
        %742 = vmatprep.subr.mxu0 0.0
        %743 = vmatpush2.msra.mxu0 0.0
        %744 = vmatprep.subr.mxu0 0.0
        %745 = vmatpush2.msra.mxu0 0.0
        %746 = vmatprep.mubr.f32.mxu0 0.0
        %747 = vmatmul.mubr.f32.gmra.mxu0 %v395
        %v748 = vpop.f32.mrf.mxu0
        %v749 = vadd.f32 %v243, %v748
        %v750 = vpop.f32.mrf.mxu0
        %v751 = vadd.f32 %v244, %v750
        %752 = vdwg.mxu0
        %v753 = vsub.f32 %v464, %v606
        %v754 = vsub.f32 %v466, %v608
        %v755 = vadd.f32 %v753, %v749
        %v756 = vadd.f32 %v754, %v751
        %v757 = vmul.f32 %v468, %v755
        %v758 = vmul.f32 %v468, %v756
        %v759 = vadd.f32 %v249, %v757
        %v760 = vadd.f32 %v250, %v758
        %761 = vrot.lane.b32.xlu0 %v759, 17
        %v762 = vpop.permute.xlu0 %761
        %763 = vrot.lane.b32.xlu0 %v760, 17
        %v764 = vpop.permute.xlu0 %763
        %v765 = vsel %vm261, %v762, %v764
        %v766 = vsel %vm261, %v764, %v762
        %v767 = vmul.f32 %v766, %v267
        %v768 = vmul.f32 %v765, %v271
        %769 = vrot.lane.b32.xlu0 %v759, 16
        %v770 = vpop.permute.xlu0 %769
        %771 = vrot.lane.b32.xlu0 %v760, 16
        %v772 = vpop.permute.xlu0 %771
        %v773 = vsel %vm278, %v770, %v772
        %v774 = vsel %vm278, %v772, %v770
        %v775 = vmul.f32 %v774, %v284
        %v776 = vmul.f32 %v773, %v288
        %777 = vrot.lane.b32.xlu0 %v759, 15
        %v778 = vpop.permute.xlu0 %777
        %779 = vrot.lane.b32.xlu0 %v760, 15
        %v780 = vpop.permute.xlu0 %779
        %v781 = vsel %vm295, %v778, %v780
        %v782 = vsel %vm295, %v780, %v778
        %v783 = vmul.f32 %v782, %v301
        %v784 = vmul.f32 %v781, %v305
        %785 = vrot.lane.b32.xlu0 %v759, 1
        %v786 = vpop.permute.xlu0 %785
        %787 = vrot.lane.b32.xlu0 %v760, 1
        %v788 = vpop.permute.xlu0 %787
        %v789 = vsel %vm312, %v786, %v788
        %v790 = vsel %vm312, %v788, %v786
        %v791 = vmul.f32 %v790, %v318
        %v792 = vmul.f32 %v789, %v322
        %793 = vrot.lane.b32.xlu0 %v759, 127
        %v794 = vpop.permute.xlu0 %793
        %795 = vrot.lane.b32.xlu0 %v760, 127
        %v796 = vpop.permute.xlu0 %795
        %v797 = vsel %vm329, %v794, %v796
        %v798 = vsel %vm329, %v796, %v794
        %v799 = vmul.f32 %v797, %v335
        %v800 = vmul.f32 %v798, %v339
        %801 = vrot.lane.b32.xlu0 %v759, 113
        %v802 = vpop.permute.xlu0 %801
        %803 = vrot.lane.b32.xlu0 %v760, 113
        %v804 = vpop.permute.xlu0 %803
        %v805 = vsel %vm346, %v802, %v804
        %v806 = vsel %vm346, %v804, %v802
        %v807 = vmul.f32 %v805, %v352
        %v808 = vmul.f32 %v806, %v356
        %809 = vrot.lane.b32.xlu0 %v759, 112
        %v810 = vpop.permute.xlu0 %809
        %811 = vrot.lane.b32.xlu0 %v760, 112
        %v812 = vpop.permute.xlu0 %811
        %v813 = vsel %vm363, %v810, %v812
        %v814 = vsel %vm363, %v812, %v810
        %v815 = vmul.f32 %v813, %v369
        %v816 = vmul.f32 %v814, %v373
        %817 = vrot.lane.b32.xlu0 %v759, 111
        %v818 = vpop.permute.xlu0 %817
        %819 = vrot.lane.b32.xlu0 %v760, 111
        %v820 = vpop.permute.xlu0 %819
        %v821 = vsel %vm380, %v818, %v820
        %v822 = vsel %vm380, %v820, %v818
        %v823 = vmul.f32 %v821, %v386
        %v824 = vmul.f32 %v822, %v390
        %825 = vmatprep.subr.mxu0 0.0
        %826 = vmatpush1.msra.mxu0 0.0
        %827 = vmatprep.subr.mxu0 0.0
        %828 = vmatpush1.msra.mxu0 0.0
        %829 = vmatprep.subr.mxu0 0.0
        %830 = vmatpush1.msra.mxu0 0.0
        %831 = vmatprep.subr.mxu0 0.0
        %832 = vmatpush1.msra.mxu0 0.0
        %833 = vmatprep.subr.mxu0 0.0
        %834 = vmatpush1.msra.mxu0 0.0
        %835 = vmatprep.subr.mxu0 0.0
        %836 = vmatpush1.msra.mxu0 0.0
        %837 = vmatprep.subr.mxu0 0.0
        %838 = vmatpush1.msra.mxu0 0.0
        %839 = vmatprep.subr.mxu0 %v824
        %840 = vmatpush1.msra.mxu0 %v823
        %841 = vmatprep.subr.mxu0 %v816
        %842 = vmatpush1.msra.mxu0 %v815
        %843 = vmatprep.subr.mxu0 %v808
        %844 = vmatpush1.msra.mxu0 %v807
        %845 = vmatprep.subr.mxu0 %v800
        %846 = vmatpush1.msra.mxu0 %v799
        %847 = vmatprep.subr.mxu0 %v760
        %848 = vmatpush1.msra.mxu0 %v759
        %849 = vmatprep.subr.mxu0 %v792
        %850 = vmatpush1.msra.mxu0 %v791
        %851 = vmatprep.subr.mxu0 %v784
        %852 = vmatpush1.msra.mxu0 %v783
        %853 = vmatprep.subr.mxu0 %v776
        %854 = vmatpush1.msra.mxu0 %v775
        %855 = vmatprep.subr.mxu0 %v768
        %856 = vmatpush1.msra.mxu0 %v767
        %857 = vmatprep.subr.mxu0 0.0
        %858 = vmatpush2.msra.mxu0 0.0
        %859 = vmatprep.subr.mxu0 0.0
        %860 = vmatpush2.msra.mxu0 0.0
        %861 = vmatprep.subr.mxu0 0.0
        %862 = vmatpush2.msra.mxu0 0.0
        %863 = vmatprep.subr.mxu0 0.0
        %864 = vmatpush2.msra.mxu0 0.0
        %865 = vmatprep.subr.mxu0 0.0
        %866 = vmatpush2.msra.mxu0 0.0
        %867 = vmatprep.subr.mxu0 0.0
        %868 = vmatpush2.msra.mxu0 0.0
        %869 = vmatprep.subr.mxu0 0.0
        %870 = vmatpush2.msra.mxu0 0.0
        %871 = vmatprep.subr.mxu0 0.0
        %872 = vmatpush2.msra.mxu0 0.0
        %873 = vmatprep.subr.mxu0 0.0
        %874 = vmatpush2.msra.mxu0 0.0
        %875 = vmatprep.subr.mxu0 0.0
        %876 = vmatpush2.msra.mxu0 0.0
        %877 = vmatprep.subr.mxu0 0.0
        %878 = vmatpush2.msra.mxu0 0.0
        %879 = vmatprep.subr.mxu0 0.0
        %880 = vmatpush2.msra.mxu0 0.0
        %881 = vmatprep.subr.mxu0 0.0
        %882 = vmatpush2.msra.mxu0 0.0
        %883 = vmatprep.subr.mxu0 0.0
        %884 = vmatpush2.msra.mxu0 0.0
        %885 = vmatprep.subr.mxu0 0.0
        %886 = vmatpush2.msra.mxu0 0.0
        %887 = vmatprep.subr.mxu0 0.0
        %888 = vmatpush2.msra.mxu0 0.0
        %889 = vmatprep.mubr.f32.mxu0 0.0
        %890 = vmatmul.mubr.f32.gmra.mxu0 %v395
        %v891 = vpop.f32.mrf.mxu0
        %v892 = vadd.f32 %v243, %v891
        %v893 = vpop.f32.mrf.mxu0
        %v894 = vadd.f32 %v244, %v893
        %895 = vdwg.mxu0
        %v896 = vadd.f32 %v606, %v749
        %v897 = vadd.f32 %v608, %v751
        %v898 = vmul.f32 %v896, 3.0
        %v899 = vmul.f32 %v897, 3.0
        %v900 = vadd.f32 %v464, %v898
        %v901 = vadd.f32 %v466, %v899
        %v902 = vadd.f32 %v900, %v892
        %v903 = vadd.f32 %v901, %v894
        %v904 = vmul.f32 %v468, %v902
        %v905 = vmul.f32 %v468, %v903
        %v906 = vmul.f32 %v904, 0.125
        %v907 = vmul.f32 %v905, 0.125
        %v908 = vadd.f32 %v249, %v906
        %v909 = vadd.f32 %v250, %v907
        %910 = vst [vmem:[#allocation2] sm:$0xff] %v908
        %911 = vst [vmem:[#allocation2 + $0x8] sm:$0xff] %v909
        %912 = vst [vmem:[%s233] sm:$0xff] %v908
        %913 = vst [vmem:[%s233 + $0x8] sm:$0xff] %v909
        %s914 = sand.u32 %s118, 1
        %s915 = scalar_lea.sflag [#allocation7], %s914
        %s916 = sand.u32 %s118, 1
        %s917 = smul.addr %s916, 16
        %s918 = scalar_lea.vmem [#allocation13], %s917
        // Predicated region
        $region57: #{tpu_custom_call.1} parent=35 // pred_check
          %p919 = pneg %p128
        $region58: #{tpu_custom_call.1} parent=35 // pred_check_branch
          %921 = sbr.rel (%p919) target = $region60
        $region59: #{tpu_custom_call.1} parent=35 // pred_region
          %s923 = ssub.s32 256, 256
          %924 = vsyncadd %s915, %s923
          %s925 = smul.addr %s26, 2
          %s926 = smul.addr %s925, 128
          %s927 = scalar_lea.hbm %s5, %s926
          %s929 = sshll.u32 %s918, 4
          %s930 = int_to_ptr.vmem [resolvable:$true] %s929
          %932 = dma.vmem_to_hbm [thread:$0]  %s930, 256, %s927, %s915
        $region60: #{tpu_custom_call.1} parent=35 // pred_fallthru
          _
      $region36: #{tpu_custom_call.1} parent=5 // pred_fallthru
        _
      %p933 = scmp.le.s32.totalorder 2, %s21
      // Predicated region
      $region61: #{tpu_custom_call.1} parent=5 // pred_check
        %p934 = pneg %p933
      $region62: #{tpu_custom_call.1} parent=5 // pred_check_branch
        %936 = sbr.rel (%p934) target = $region64
      $region63: #{tpu_custom_call.1} parent=5 // pred_region
        %s937 = ssub.s32 %s21, 2
        // Predicated region
        $region65: #{tpu_custom_call.1} parent=63 // pred_check
          %p938 = pneg %p134
        $region66: #{tpu_custom_call.1} parent=63 // pred_check_branch
          %940 = sbr.rel (%p938) target = $region68
        $region67: #{tpu_custom_call.1} parent=63 // pred_region
          %s941 = sand.u32 %s119, 1
          %s942 = scalar_lea.sflag [#allocation7], %s941
          %s943 = sand.u32 %s119, 1
          %s944 = smul.addr %s943, 16
          %s945 = scalar_lea.vmem [#allocation13], %s944
          %946 = dma.done %s942, 256
        $region68: #{tpu_custom_call.1} parent=63 // pred_fallthru
          _
      $region64: #{tpu_custom_call.1} parent=5 // pred_fallthru
        _
    $region6: #{tpu_custom_call.1} parent=1 // loop_footer
      %s25 = sadd.s32 1, %s21
    $region7: #{tpu_custom_call.1} parent=1 // loop_footer_branch
      %20 = sbr.rel target = $region3
    $region8: #{tpu_custom_call.1} parent=1 // loop_exit
      _
    %947 = vsyncpa [#allocation6], 1
    %s948 = scalar_lea.sflag [#allocation6], 1
    %949 = vsyncpa %s948, 1
    %950 = vsyncpa [#allocation9], 1
    %951 = vsyncpa [#allocation12], 1
    %952 = vsyncpa [#allocation7], 1
    %s953 = scalar_lea.sflag [#allocation7], 1
    %954 = vsyncpa %s953, 1

</llo_original>
